<compile_context>
chip_gen: v7x
topology: tpu7x:2x2x1
jax: 0.10.0
libtpu: 0.0.40
codegen_flags: <defaults>
</compile_context>

<pallas_src>
import math
import jax
import jax.numpy as jnp
from jax.experimental import pallas as pl
from jax.experimental.pallas import tpu as pltpu

D_MODEL = 22
MAX_LEN = 9
C_RES = 128
OUT_DIM = 2
TARGET_TB = 256   # batch rows per grid tile at large batch (multiple of 128)


def _gelu_exact(x):
    # PyTorch nn.GELU() default = exact erf-based GELU (kept for 1e-4 parity).
    return 0.5 * x * (1.0 + jax.lax.erf(x * 0.7071067811865476))


def _round_up(x, m):
    return ((x + m - 1) // m) * m


def _choose_tb(batch: int, target: int = TARGET_TB) -> int:
    """Pick the per-grid-step batch tile size.

    * batch <= 128: one tile covering the (8-rounded) batch; block == full array,
      so the 128-multiple lane constraint does not apply.
    * batch  > 128: tiles must be a multiple of 128 (x / out block lane dims are
      tb*9 and tb), aim for >= 2 grid steps so both v7x TensorCores get work, and
      cap at `target` so the resident selector / tiled-bias stay v7x-VMEM-safe.
    """
    if batch <= 128:
        return _round_up(batch, 8)
    return max(128, min(target, _round_up(_round_up(batch, 2) // 2, 128)))


def reswise_kernel(xt_ref, w1t_ref, b1pt_ref, w2t_ref, w3t_ref, selt_ref,
                   bout_ref, out_ref):
    # res_transition Linear(22,128): (C, D) @ (D, tb*L) -> (C, tb*L).
    # Positional encoding + b1 arrive pre-folded/tiled as b1pt (C, tb*L).
    h = jnp.dot(w1t_ref[...], xt_ref[...], preferred_element_type=jnp.float32)
    h = _gelu_exact(h + b1pt_ref[...])

    # Linear(128,1): one-row MXU matmul -> residue scores as a lane-dense row
    # (1, tb*L).  Its bias b2 is folded into bout in the wrapper.
    p = jnp.dot(w2t_ref[...], h, preferred_element_type=jnp.float32)

    # output_linear Linear(9,2): scale by tiled w3^T (tiny VPU mul), then sum the
    # L lanes of each batch element with a resident 0/1 selector on the MXU
    # (M=2 matmul) -> lane-dense (2, tb) output block.
    scaled = p * w3t_ref[...]                                    # (2, tb*L)
    out_ref[...] = (jnp.dot(scaled, selt_ref[...],
                            preferred_element_type=jnp.float32)
                    + bout_ref[...])


def reswise_forward(x, pe, w1, b1, w2, b2, w3, b3, *, target_tb=TARGET_TB):
    B, L, D = x.shape
    C = w1.shape[1]
    O = w3.shape[1]

    tb = _choose_tb(B, target_tb)
    Bp = _round_up(B, tb)
    T = tb * L                       # residue columns per grid step

    # ---- wrapper-side layout & algebra plumbing (done once, outside the kernel) ----
    # residues-on-lanes presentation of the input: x_t[d, b*L + l] = x[b, l, d]
    x_t = jnp.transpose(x, (2, 0, 1)).reshape(D, B * L)
    if Bp != B:
        x_t = jnp.pad(x_t, ((0, 0), (0, (Bp - B) * L)))          # zero-padded batches

    w1t = w1.T                                                   # (C, D)
    b1pt = jnp.tile((pe @ w1 + b1).T, (1, tb))                   # (C, T) pe folded in
    w2t = w2.reshape(1, C)                                       # (1, C)
    w3t = jnp.tile(w3.T, (1, tb))                                # (O, T)
    r = jnp.arange(T)
    selt = (r[:, None] // L == jnp.arange(tb)[None, :]).astype(jnp.float32)  # (T, tb)
    bout = (b2.reshape(()) * jnp.sum(w3, axis=0) + b3.reshape(-1)).reshape(O, 1)

    grid = (Bp // tb,)
    out_t = pl.pallas_call(
        reswise_kernel,
        out_shape=jax.ShapeDtypeStruct((O, Bp), jnp.float32),
        grid=grid,
        in_specs=[
            pl.BlockSpec((D, T), lambda i: (0, i)),      # x^T, tiled over batch lanes
            pl.BlockSpec((C, D), lambda i: (0, 0)),      # w1^T           (resident)
            pl.BlockSpec((C, T), lambda i: (0, 0)),      # (pe@w1+b1)^T tiled (resident)
            pl.BlockSpec((1, C), lambda i: (0, 0)),      # w2 row          (resident)
            pl.BlockSpec((O, T), lambda i: (0, 0)),      # w3^T tiled      (resident)
            pl.BlockSpec((T, tb), lambda i: (0, 0)),     # segment selector (resident)
            pl.BlockSpec((O, 1), lambda i: (0, 0)),      # folded output bias (resident)
        ],
        out_specs=pl.BlockSpec((O, tb), lambda i: (0, i)),   # lane-dense (2, tb) block
        compiler_params=pltpu.CompilerParams(
            dimension_semantics=("parallel",),
            vmem_limit_bytes=32 * 1024 * 1024,
        ),
    )(x_t, w1t, b1pt, w2t, w3t, selt, bout)

    return out_t.T[:B]                                           # (B, 2)


def make_positional_encoding(d_model, max_len):
    position = jnp.arange(max_len, dtype=jnp.float32)[:, None]
    div_term = jnp.exp(jnp.arange(0, d_model, 2, dtype=jnp.float32)
                       * (-math.log(10000.0) / d_model))
    pe = jnp.zeros((max_len, d_model), dtype=jnp.float32)
    pe = pe.at[:, 0::2].set(jnp.sin(position * div_term))
    pe = pe.at[:, 1::2].set(jnp.cos(position * div_term))
    return pe


def init_params(key):
    # Deterministic synthetic init (PyTorch-Linear-style uniform bounds).
    k1, k2, k3, k4, k5, k6 = jax.random.split(key, 6)

    def lin(kw, kb, fan_in, fan_out):
        bound = 1.0 / math.sqrt(fan_in)
        w = jax.random.uniform(kw, (fan_in, fan_out), jnp.float32, -bound, bound)
        b = jax.random.uniform(kb, (1, fan_out), jnp.float32, -bound, bound)
        return w, b

    w1, b1 = lin(k1, k2, D_MODEL, C_RES)     # Linear(22, 128)
    w2, b2 = lin(k3, k4, C_RES, 1)           # Linear(128, 1)
    w3, b3 = lin(k5, k6, MAX_LEN, OUT_DIM)   # Linear(9, 2)
    return w1, b1, w2, b2, w3, b3


def reference_forward(x, pe, w1, b1, w2, b2, w3, b3):
    x = x + pe[None, :, :]
    h = _gelu_exact(x @ w1 + b1)
    p = (h @ w2 + b2)[..., 0]
    return p @ w3 + b3


if __name__ == "__main__":
    key = jax.random.PRNGKey(0)
    kx, kp = jax.random.split(key)

    pe = make_positional_encoding(D_MODEL, MAX_LEN)
    w1, b1, w2, b2, w3, b3 = init_params(kp)

    # primary run: small batch -> single full-batch tile (tb = 16), grid = (1,)
    B = 16
    x = jax.random.normal(kx, (B, MAX_LEN, D_MODEL), dtype=jnp.float32)
    out = jax.block_until_ready(reswise_forward(x, pe, w1, b1, w2, b2, w3, b3))
    ref = reference_forward(x, pe, w1, b1, w2, b2, w3, b3)
    assert out.shape == (B, OUT_DIM)
    assert jnp.allclose(out, ref, atol=1e-4, rtol=1e-4)

    # ragged small batch (B=3 -> padded to one 8-row tile, sliced back)
    x2 = x[:3]
    out2 = jax.block_until_ready(reswise_forward(x2, pe, w1, b1, w2, b2, w3, b3))
    ref2 = reference_forward(x2, pe, w1, b1, w2, b2, w3, b3)
    assert out2.shape == (3, OUT_DIM)
    assert jnp.allclose(out2, ref2, atol=1e-4, rtol=1e-4)

    # multi-tile path: B=200 -> tb=128 (multiple of 128), Bp=256, grid = (2,)
    B3 = 200
    x3 = jax.random.normal(jax.random.PRNGKey(7), (B3, MAX_LEN, D_MODEL),
                           dtype=jnp.float32)
    out3 = jax.block_until_ready(reswise_forward(x3, pe, w1, b1, w2, b2, w3, b3))
    ref3 = reference_forward(x3, pe, w1, b1, w2, b2, w3, b3)
    assert out3.shape == (B3, OUT_DIM)
    assert jnp.allclose(out3, ref3, atol=1e-4, rtol=1e-4)

    print("KERNEL_OK")
</pallas_src>

<mosaic_0001>
module attributes {stable_mosaic.version = 11 : i64} {
  func.func @reswise_kernel(%arg0: i32, %arg1: memref<22x144xf32, #tpu.memory_space<vmem>>, %arg2: memref<128x22xf32, #tpu.memory_space<vmem>>, %arg3: memref<128x144xf32, #tpu.memory_space<vmem>>, %arg4: memref<1x128xf32, #tpu.memory_space<vmem>>, %arg5: memref<2x144xf32, #tpu.memory_space<vmem>>, %arg6: memref<144x16xf32, #tpu.memory_space<vmem>>, %arg7: memref<2x1xf32, #tpu.memory_space<vmem>>, %arg8: memref<2x16xf32, #tpu.memory_space<vmem>>) attributes {dimension_semantics = [#tpu.dimension_semantics<parallel>], iteration_bounds = array<i64: 1>, scalar_prefetch = 0 : i64, scratch_operands = 0 : i64, tpu.core_type = #tpu.core_type<tc>, window_params = [{transform_indices = @transform_0, window_bounds = array<i64: 22, 144>}, {pipeline_mode = #tpu.pipeline_mode<synchronous>, transform_indices = @transform_1, window_bounds = array<i64: 128, 22>}, {pipeline_mode = #tpu.pipeline_mode<synchronous>, transform_indices = @transform_2, window_bounds = array<i64: 128, 144>}, {pipeline_mode = #tpu.pipeline_mode<synchronous>, transform_indices = @transform_3, window_bounds = array<i64: 1, 128>}, {pipeline_mode = #tpu.pipeline_mode<synchronous>, transform_indices = @transform_4, window_bounds = array<i64: 2, 144>}, {pipeline_mode = #tpu.pipeline_mode<synchronous>, transform_indices = @transform_5, window_bounds = array<i64: 144, 16>}, {pipeline_mode = #tpu.pipeline_mode<synchronous>, transform_indices = @transform_6, window_bounds = array<i64: 2, 1>}, {transform_indices = @transform_7, window_bounds = array<i64: 2, 16>}]} {
    %c0 = arith.constant 0 : index
    %c0_0 = arith.constant 0 : index
    %0 = vector.load %arg2[%c0, %c0_0] : memref<128x22xf32, #tpu.memory_space<vmem>>, vector<128x22xf32>
    %c0_1 = arith.constant 0 : index
    %c0_2 = arith.constant 0 : index
    %1 = vector.load %arg1[%c0_1, %c0_2] : memref<22x144xf32, #tpu.memory_space<vmem>>, vector<22x144xf32>
    %cst = arith.constant dense<0.000000e+00> : vector<128x144xf32>
    %2 = tpu.matmul %0, %1, %cst {dimension_numbers = #tpu.dot_dimension_numbers<[1], [0], [0], [1], [0, 0, 1, 1], [], []>} : vector<128x22xf32>, vector<22x144xf32>, vector<128x144xf32> -> vector<128x144xf32>
    %c0_3 = arith.constant 0 : index
    %c0_4 = arith.constant 0 : index
    %3 = vector.load %arg3[%c0_3, %c0_4] : memref<128x144xf32, #tpu.memory_space<vmem>>, vector<128x144xf32>
    %4 = arith.addf %2, %3 : vector<128x144xf32>
    %cst_5 = arith.constant 5.000000e-01 : f32
    %5 = vector.broadcast %cst_5 : f32 to vector<128x144xf32>
    %6 = arith.mulf %5, %4 : vector<128x144xf32>
    %cst_6 = arith.constant 0.707106769 : f32
    %7 = vector.broadcast %cst_6 : f32 to vector<128x144xf32>
    %8 = arith.mulf %4, %7 : vector<128x144xf32>
    %9 = math.erf %8 : vector<128x144xf32>
    %cst_7 = arith.constant 1.000000e+00 : f32
    %10 = vector.broadcast %cst_7 : f32 to vector<128x144xf32>
    %11 = arith.addf %10, %9 : vector<128x144xf32>
    %12 = arith.mulf %6, %11 : vector<128x144xf32>
    %c0_8 = arith.constant 0 : index
    %c0_9 = arith.constant 0 : index
    %13 = vector.load %arg4[%c0_8, %c0_9] : memref<1x128xf32, #tpu.memory_space<vmem>>, vector<1x128xf32>
    %cst_10 = arith.constant dense<0.000000e+00> : vector<1x144xf32>
    %14 = tpu.matmul %13, %12, %cst_10 {dimension_numbers = #tpu.dot_dimension_numbers<[1], [0], [0], [1], [0, 0, 1, 1], [], []>} : vector<1x128xf32>, vector<128x144xf32>, vector<1x144xf32> -> vector<1x144xf32>
    %c0_11 = arith.constant 0 : index
    %c0_12 = arith.constant 0 : index
    %15 = vector.load %arg5[%c0_11, %c0_12] : memref<2x144xf32, #tpu.memory_space<vmem>>, vector<2x144xf32>
    %16 = vector.broadcast %14 : vector<1x144xf32> to vector<2x144xf32>
    %17 = arith.mulf %16, %15 : vector<2x144xf32>
    %c0_13 = arith.constant 0 : index
    %c0_14 = arith.constant 0 : index
    %18 = vector.load %arg6[%c0_13, %c0_14] : memref<144x16xf32, #tpu.memory_space<vmem>>, vector<144x16xf32>
    %cst_15 = arith.constant dense<0.000000e+00> : vector<2x16xf32>
    %19 = tpu.matmul %17, %18, %cst_15 {dimension_numbers = #tpu.dot_dimension_numbers<[1], [0], [0], [1], [0, 0, 1, 1], [], []>} : vector<2x144xf32>, vector<144x16xf32>, vector<2x16xf32> -> vector<2x16xf32>
    %c0_16 = arith.constant 0 : index
    %c0_17 = arith.constant 0 : index
    %20 = vector.load %arg7[%c0_16, %c0_17] : memref<2x1xf32, #tpu.memory_space<vmem>>, vector<2x1xf32>
    %21 = vector.broadcast %20 : vector<2x1xf32> to vector<2x16xf32>
    %22 = arith.addf %19, %21 : vector<2x16xf32>
    %c0_18 = arith.constant 0 : index
    %c0_19 = arith.constant 0 : index
    %23 = vector.load %arg8[%c0_18, %c0_19] : memref<2x16xf32, #tpu.memory_space<vmem>>, vector<2x16xf32>
    tpu.vector_store %arg8[%c0_18, %c0_19], %22 {strides = array<i32>} : memref<2x16xf32, #tpu.memory_space<vmem>>, vector<2x16xf32>,
    return
  }
  func.func @transform_0(%arg0: i32) -> (i32, i32) {
    %c0_i32 = arith.constant 0 : i32
    %c0_i32_0 = arith.constant 0 : i32
    return %c0_i32, %arg0 : i32, i32
  }
  func.func @transform_1(%arg0: i32) -> (i32, i32) {
    %c0_i32 = arith.constant 0 : i32
    %c0_i32_0 = arith.constant 0 : i32
    %c0_i32_1 = arith.constant 0 : i32
    return %c0_i32, %c0_i32_0 : i32, i32
  }
  func.func @transform_2(%arg0: i32) -> (i32, i32) {
    %c0_i32 = arith.constant 0 : i32
    %c0_i32_0 = arith.constant 0 : i32
    %c0_i32_1 = arith.constant 0 : i32
    return %c0_i32, %c0_i32_0 : i32, i32
  }
  func.func @transform_3(%arg0: i32) -> (i32, i32) {
    %c0_i32 = arith.constant 0 : i32
    %c0_i32_0 = arith.constant 0 : i32
    %c0_i32_1 = arith.constant 0 : i32
    return %c0_i32, %c0_i32_0 : i32, i32
  }
  func.func @transform_4(%arg0: i32) -> (i32, i32) {
    %c0_i32 = arith.constant 0 : i32
    %c0_i32_0 = arith.constant 0 : i32
    %c0_i32_1 = arith.constant 0 : i32
    return %c0_i32, %c0_i32_0 : i32, i32
  }
  func.func @transform_5(%arg0: i32) -> (i32, i32) {
    %c0_i32 = arith.constant 0 : i32
    %c0_i32_0 = arith.constant 0 : i32
    %c0_i32_1 = arith.constant 0 : i32
    return %c0_i32, %c0_i32_0 : i32, i32
  }
  func.func @transform_6(%arg0: i32) -> (i32, i32) {
    %c0_i32 = arith.constant 0 : i32
    %c0_i32_0 = arith.constant 0 : i32
    %c0_i32_1 = arith.constant 0 : i32
    return %c0_i32, %c0_i32_0 : i32, i32
  }
  func.func @transform_7(%arg0: i32) -> (i32, i32) {
    %c0_i32 = arith.constant 0 : i32
    %c0_i32_0 = arith.constant 0 : i32
    return %c0_i32, %arg0 : i32, i32
  }
}

</mosaic_0001>

<llo_original>
// kernel: tpu_custom_call.1
$region0: #{tpu_custom_call.1}
  #allocation0 [shape = 'u32[]', space=smem, size = 0x4, offset = 0x4, fixed_abs, tag = 'smem constant byte address 0x4 - core index']
  #allocation1 [shape = 'u32[144,128]{1,0:T(1,128)}', space=vmem, size = 0x12000, scoped, tag = 'internal scratch']
  %s0 = inlined_call_operand.vmem [shape: f32[22,144], index: 0, kind: input, shape index: {}]
  %s1 = inlined_call_operand.vmem [shape: f32[128,22], index: 1, kind: input, shape index: {}]
  %s2 = inlined_call_operand.vmem [shape: f32[128,144], index: 2, kind: input, shape index: {}]
  %s3 = inlined_call_operand.vmem [shape: f32[1,128], index: 3, kind: input, shape index: {}]
  %s4 = inlined_call_operand.vmem [shape: f32[2,144], index: 4, kind: input, shape index: {}]
  %s5 = inlined_call_operand.vmem [shape: f32[144,16], index: 5, kind: input, shape index: {}]
  %s6 = inlined_call_operand.vmem [shape: f32[2,1], index: 6, kind: input, shape index: {}]
  %s7 = inlined_call_operand.hbm [shape: f32[2,16], index: 7, kind: output, shape index: {}]
  %s8 = sld [smem:[#allocation0]]
  $region38: #{tpu_custom_call.1} parent=0
    _
  %s10 = ssub.s32 1, %s8
  %s11 = scalar_select 0, %s10, %s8
  $region1: #{tpu_custom_call.1} parent=0
    #allocation2 [shape = 'u8[1024]{0}', space=vmem, size = 0x400, scoped, tag = 'output window, operand 0, single buffered']
    #allocation3 [shape = 's32[1]{0}', space=sflag, size = 0x4, scoped, tag = 'scoped memory for tpu_custom_call.1']
    %12 = vsyncpa [#allocation3], 0
    // Predicated region
    $region2: #{tpu_custom_call.1} parent=1 // pred_check
      _
    $region3: #{tpu_custom_call.1} parent=1 // pred_check_branch
      %14 = sbr.rel (0) target = $region5
    $region4: #{tpu_custom_call.1} parent=1 // pred_region
      _
    $region5: #{tpu_custom_call.1} parent=1 // pred_fallthru
      _
    // Predicated region
    $region6: #{tpu_custom_call.1} parent=1 // pred_check
      _
    $region7: #{tpu_custom_call.1} parent=1 // pred_check_branch
      %16 = sbr.rel (0) target = $region9
    $region8: #{tpu_custom_call.1} parent=1 // pred_region
      _
    $region9: #{tpu_custom_call.1} parent=1 // pred_fallthru
      _
    // Predicated region
    $region10: #{tpu_custom_call.1} parent=1 // pred_check
      _
    $region11: #{tpu_custom_call.1} parent=1 // pred_check_branch
      %18 = sbr.rel (0) target = $region13
    $region12: #{tpu_custom_call.1} parent=1 // pred_region
      _
    $region13: #{tpu_custom_call.1} parent=1 // pred_fallthru
      _
    // Predicated region
    $region14: #{tpu_custom_call.1} parent=1 // pred_check
      _
    $region15: #{tpu_custom_call.1} parent=1 // pred_check_branch
      %20 = sbr.rel (0) target = $region17
    $region16: #{tpu_custom_call.1} parent=1 // pred_region
      _
    $region17: #{tpu_custom_call.1} parent=1 // pred_fallthru
      _
    // Predicated region
    $region18: #{tpu_custom_call.1} parent=1 // pred_check
      _
    $region19: #{tpu_custom_call.1} parent=1 // pred_check_branch
      %22 = sbr.rel (0) target = $region21
    $region20: #{tpu_custom_call.1} parent=1 // pred_region
      _
    $region21: #{tpu_custom_call.1} parent=1 // pred_fallthru
      _
    // Predicated region
    $region22: #{tpu_custom_call.1} parent=1 // pred_check
      _
    $region23: #{tpu_custom_call.1} parent=1 // pred_check_branch
      %24 = sbr.rel (0) target = $region25
    $region24: #{tpu_custom_call.1} parent=1 // pred_region
      _
    $region25: #{tpu_custom_call.1} parent=1 // pred_fallthru
      _
    // Predicated region
    $region26: #{tpu_custom_call.1} parent=1 // pred_check
      _
    $region27: #{tpu_custom_call.1} parent=1 // pred_check_branch
      %26 = sbr.rel (0) target = $region29
    $region28: #{tpu_custom_call.1} parent=1 // pred_region
      _
    $region29: #{tpu_custom_call.1} parent=1 // pred_fallthru
      _
    %v27 = vld [vmem:[%s1] sm:$0xff]
    %v28 = vld [vmem:[%s1 + $0x8] sm:$0xff]
    %v29 = vld [vmem:[%s1 + $0x10] sm:$0xff]
    %v30 = vld [vmem:[%s1 + $0x18] sm:$0xff]
    %v31 = vld [vmem:[%s1 + $0x20] sm:$0xff]
    %v32 = vld [vmem:[%s1 + $0x28] sm:$0xff]
    %v33 = vld [vmem:[%s1 + $0x30] sm:$0xff]
    %v34 = vld [vmem:[%s1 + $0x38] sm:$0xff]
    %v35 = vld [vmem:[%s1 + $0x40] sm:$0xff]
    %v36 = vld [vmem:[%s1 + $0x48] sm:$0xff]
    %v37 = vld [vmem:[%s1 + $0x50] sm:$0xff]
    %v38 = vld [vmem:[%s1 + $0x58] sm:$0xff]
    %v39 = vld [vmem:[%s1 + $0x60] sm:$0xff]
    %v40 = vld [vmem:[%s1 + $0x68] sm:$0xff]
    %v41 = vld [vmem:[%s1 + $0x70] sm:$0xff]
    %v42 = vld [vmem:[%s1 + $0x78] sm:$0xff]
    %v43 = vld [vmem:[%s0] sm:$0xff]
    %v44 = vld [vmem:[%s0 + $0x8] sm:$0xff]
    %v45 = vld [vmem:[%s0 + $0x10] sm:$0xff]
    %v46 = vld [vmem:[%s0 + $0x18] sm:$0xff]
    %v47 = vld [vmem:[%s0 + $0x20] sm:$0x3f]
    %v48 = vld [vmem:[%s0 + $0x28] sm:$0x3f]
    %v49 = vld [vmem:[%s2] sm:$0xff]
    %v50 = vld [vmem:[%s2 + $0x8] sm:$0xff]
    %v51 = vld [vmem:[%s2 + $0x10] sm:$0xff]
    %v52 = vld [vmem:[%s2 + $0x18] sm:$0xff]
    %v53 = vld [vmem:[%s2 + $0x20] sm:$0xff]
    %v54 = vld [vmem:[%s2 + $0x28] sm:$0xff]
    %v55 = vld [vmem:[%s2 + $0x30] sm:$0xff]
    %v56 = vld [vmem:[%s2 + $0x38] sm:$0xff]
    %v57 = vld [vmem:[%s2 + $0x40] sm:$0xff]
    %v58 = vld [vmem:[%s2 + $0x48] sm:$0xff]
    %v59 = vld [vmem:[%s2 + $0x50] sm:$0xff]
    %v60 = vld [vmem:[%s2 + $0x58] sm:$0xff]
    %v61 = vld [vmem:[%s2 + $0x60] sm:$0xff]
    %v62 = vld [vmem:[%s2 + $0x68] sm:$0xff]
    %v63 = vld [vmem:[%s2 + $0x70] sm:$0xff]
    %v64 = vld [vmem:[%s2 + $0x78] sm:$0xff]
    %v65 = vld [vmem:[%s2 + $0x80] sm:$0xff]
    %v66 = vld [vmem:[%s2 + $0x88] sm:$0xff]
    %v67 = vld [vmem:[%s2 + $0x90] sm:$0xff]
    %v68 = vld [vmem:[%s2 + $0x98] sm:$0xff]
    %v69 = vld [vmem:[%s2 + $0xa0] sm:$0xff]
    %v70 = vld [vmem:[%s2 + $0xa8] sm:$0xff]
    %v71 = vld [vmem:[%s2 + $0xb0] sm:$0xff]
    %v72 = vld [vmem:[%s2 + $0xb8] sm:$0xff]
    %v73 = vld [vmem:[%s2 + $0xc0] sm:$0xff]
    %v74 = vld [vmem:[%s2 + $0xc8] sm:$0xff]
    %v75 = vld [vmem:[%s2 + $0xd0] sm:$0xff]
    %v76 = vld [vmem:[%s2 + $0xd8] sm:$0xff]
    %v77 = vld [vmem:[%s2 + $0xe0] sm:$0xff]
    %v78 = vld [vmem:[%s2 + $0xe8] sm:$0xff]
    %v79 = vld [vmem:[%s2 + $0xf0] sm:$0xff]
    %v80 = vld [vmem:[%s2 + $0xf8] sm:$0xff]
    %vm81 = vcmask 179200
    %v83 = vsel %vm81, %v27, 0
    %v86 = vsel %vm81, %v28, 0
    %v89 = vsel %vm81, %v29, 0
    %v92 = vsel %vm81, %v30, 0
    %v95 = vsel %vm81, %v31, 0
    %v98 = vsel %vm81, %v32, 0
    %v101 = vsel %vm81, %v33, 0
    %v104 = vsel %vm81, %v34, 0
    %v107 = vsel %vm81, %v35, 0
    %v110 = vsel %vm81, %v36, 0
    %v113 = vsel %vm81, %v37, 0
    %v116 = vsel %vm81, %v38, 0
    %v119 = vsel %vm81, %v39, 0
    %v122 = vsel %vm81, %v40, 0
    %v125 = vsel %vm81, %v41, 0
    %v128 = vsel %vm81, %v42, 0
    %vm130 = vcmask 1045504
    %v132 = vsel %vm130, %v47, 0
    %v135 = vsel %vm130, %v48, 0
    %137 = vmatprep.subr.mxu0 %v44
    %138 = vmatpush1.msra.mxu0 %v43
    %139 = vmatprep.subr.mxu0 %v46
    %140 = vmatpush1.msra.mxu0 %v45
    %141 = vmatprep.subr.mxu0 %v135
    %142 = vmatpush1.msra.mxu0 %v132
    %143 = vmatprep.subr.mxu0 0.0
    %144 = vmatpush1.msra.mxu0 0.0
    %145 = vmatprep.subr.mxu0 0.0
    %146 = vmatpush1.msra.mxu0 0.0
    %147 = vmatprep.subr.mxu0 0.0
    %148 = vmatpush1.msra.mxu0 0.0
    %149 = vmatprep.subr.mxu0 0.0
    %150 = vmatpush1.msra.mxu0 0.0
    %151 = vmatprep.subr.mxu0 0.0
    %152 = vmatpush1.msra.mxu0 0.0
    %153 = vmatprep.subr.mxu0 0.0
    %154 = vmatpush1.msra.mxu0 0.0
    %155 = vmatprep.subr.mxu0 0.0
    %156 = vmatpush1.msra.mxu0 0.0
    %157 = vmatprep.subr.mxu0 0.0
    %158 = vmatpush1.msra.mxu0 0.0
    %159 = vmatprep.subr.mxu0 0.0
    %160 = vmatpush1.msra.mxu0 0.0
    %161 = vmatprep.subr.mxu0 0.0
    %162 = vmatpush1.msra.mxu0 0.0
    %163 = vmatprep.subr.mxu0 0.0
    %164 = vmatpush1.msra.mxu0 0.0
    %165 = vmatprep.subr.mxu0 0.0
    %166 = vmatpush1.msra.mxu0 0.0
    %167 = vmatprep.subr.mxu0 0.0
    %168 = vmatpush1.msra.mxu0 0.0
    %169 = vmatprep.subr.mxu0 0.0
    %170 = vmatpush1.msra.mxu0 0.0
    %171 = vmatprep.subr.mxu0 0.0
    %172 = vmatpush1.msra.mxu0 0.0
    %173 = vmatprep.subr.mxu0 0.0
    %174 = vmatpush1.msra.mxu0 0.0
    %175 = vmatprep.subr.mxu0 0.0
    %176 = vmatpush1.msra.mxu0 0.0
    %177 = vmatprep.subr.mxu0 0.0
    %178 = vmatpush1.msra.mxu0 0.0
    %179 = vmatprep.subr.mxu0 0.0
    %180 = vmatpush1.msra.mxu0 0.0
    %181 = vmatprep.subr.mxu0 0.0
    %182 = vmatpush1.msra.mxu0 0.0
    %183 = vmatprep.subr.mxu0 0.0
    %184 = vmatpush1.msra.mxu0 0.0
    %185 = vmatprep.subr.mxu0 0.0
    %186 = vmatpush1.msra.mxu0 0.0
    %187 = vmatprep.subr.mxu0 0.0
    %188 = vmatpush1.msra.mxu0 0.0
    %189 = vmatprep.subr.mxu0 0.0
    %190 = vmatpush1.msra.mxu0 0.0
    %191 = vmatprep.subr.mxu0 0.0
    %192 = vmatpush1.msra.mxu0 0.0
    %193 = vmatprep.subr.mxu0 0.0
    %194 = vmatpush1.msra.mxu0 0.0
    %195 = vmatprep.subr.mxu0 0.0
    %196 = vmatpush1.msra.mxu0 0.0
    %197 = vmatprep.subr.mxu0 0.0
    %198 = vmatpush1.msra.mxu0 0.0
    %199 = vmatprep.subr.mxu0 0.0
    %200 = vmatpush1.msra.mxu0 0.0
    %201 = vmatprep.mubr.f32.mxu0 0.0
    %202 = vmatmul.mubr.f32.gmra.mrb[0].mxu0 %v83
    %v203 = vpop.f32.mrb[0].mxu0
    %v204 = vadd.f32 %v49, %v203
    %v205 = vpop.f32.mrb[0].mxu0
    %v206 = vadd.f32 %v50, %v205
    %207 = vmatprep.mubr.f32.mxu0 0.0
    %208 = vmatmul.mubr.f32.gmra.mrb[0].mxu0 %v86
    %v209 = vpop.f32.mrb[0].mxu0
    %v210 = vadd.f32 %v51, %v209
    %v211 = vpop.f32.mrb[0].mxu0
    %v212 = vadd.f32 %v52, %v211
    %213 = vmatprep.mubr.f32.mxu0 0.0
    %214 = vmatmul.mubr.f32.gmra.mrb[0].mxu0 %v89
    %v215 = vpop.f32.mrb[0].mxu0
    %v216 = vadd.f32 %v53, %v215
    %v217 = vpop.f32.mrb[0].mxu0
    %v218 = vadd.f32 %v54, %v217
    %219 = vmatprep.mubr.f32.mxu0 0.0
    %220 = vmatmul.mubr.f32.gmra.mrb[0].mxu0 %v92
    %v221 = vpop.f32.mrb[0].mxu0
    %v222 = vadd.f32 %v55, %v221
    %v223 = vpop.f32.mrb[0].mxu0
    %v224 = vadd.f32 %v56, %v223
    %225 = vmatprep.mubr.f32.mxu0 0.0
    %226 = vmatmul.mubr.f32.gmra.mrb[0].mxu0 %v95
    %v227 = vpop.f32.mrb[0].mxu0
    %v228 = vadd.f32 %v57, %v227
    %v229 = vpop.f32.mrb[0].mxu0
    %v230 = vadd.f32 %v58, %v229
    %231 = vmatprep.mubr.f32.mxu0 0.0
    %232 = vmatmul.mubr.f32.gmra.mrb[0].mxu0 %v98
    %v233 = vpop.f32.mrb[0].mxu0
    %v234 = vadd.f32 %v59, %v233
    %v235 = vpop.f32.mrb[0].mxu0
    %v236 = vadd.f32 %v60, %v235
    %237 = vmatprep.mubr.f32.mxu0 0.0
    %238 = vmatmul.mubr.f32.gmra.mrb[0].mxu0 %v101
    %v239 = vpop.f32.mrb[0].mxu0
    %v240 = vadd.f32 %v61, %v239
    %v241 = vpop.f32.mrb[0].mxu0
    %v242 = vadd.f32 %v62, %v241
    %243 = vmatprep.mubr.f32.mxu0 0.0
    %244 = vmatmul.mubr.f32.gmra.mrb[0].mxu0 %v104
    %v245 = vpop.f32.mrb[0].mxu0
    %v246 = vadd.f32 %v63, %v245
    %v247 = vpop.f32.mrb[0].mxu0
    %v248 = vadd.f32 %v64, %v247
    %249 = vmatprep.mubr.f32.mxu0 0.0
    %250 = vmatmul.mubr.f32.gmra.mrb[0].mxu0 %v107
    %v251 = vpop.f32.mrb[0].mxu0
    %v252 = vadd.f32 %v65, %v251
    %v253 = vpop.f32.mrb[0].mxu0
    %v254 = vadd.f32 %v66, %v253
    %255 = vmatprep.mubr.f32.mxu0 0.0
    %256 = vmatmul.mubr.f32.gmra.mrb[0].mxu0 %v110
    %v257 = vpop.f32.mrb[0].mxu0
    %v258 = vadd.f32 %v67, %v257
    %v259 = vpop.f32.mrb[0].mxu0
    %v260 = vadd.f32 %v68, %v259
    %261 = vmatprep.mubr.f32.mxu0 0.0
    %262 = vmatmul.mubr.f32.gmra.mrb[0].mxu0 %v113
    %v263 = vpop.f32.mrb[0].mxu0
    %v264 = vadd.f32 %v69, %v263
    %v265 = vpop.f32.mrb[0].mxu0
    %v266 = vadd.f32 %v70, %v265
    %267 = vmatprep.mubr.f32.mxu0 0.0
    %268 = vmatmul.mubr.f32.gmra.mrb[0].mxu0 %v116
    %v269 = vpop.f32.mrb[0].mxu0
    %v270 = vadd.f32 %v71, %v269
    %v271 = vpop.f32.mrb[0].mxu0
    %v272 = vadd.f32 %v72, %v271
    %273 = vmatprep.mubr.f32.mxu0 0.0
    %274 = vmatmul.mubr.f32.gmra.mrb[0].mxu0 %v119
    %v275 = vpop.f32.mrb[0].mxu0
    %v276 = vadd.f32 %v73, %v275
    %v277 = vpop.f32.mrb[0].mxu0
    %v278 = vadd.f32 %v74, %v277
    %279 = vmatprep.mubr.f32.mxu0 0.0
    %280 = vmatmul.mubr.f32.gmra.mrb[0].mxu0 %v122
    %v281 = vpop.f32.mrb[0].mxu0
    %v282 = vadd.f32 %v75, %v281
    %v283 = vpop.f32.mrb[0].mxu0
    %v284 = vadd.f32 %v76, %v283
    %285 = vmatprep.mubr.f32.mxu0 0.0
    %286 = vmatmul.mubr.f32.gmra.mrb[0].mxu0 %v125
    %v287 = vpop.f32.mrb[0].mxu0
    %v288 = vadd.f32 %v77, %v287
    %v289 = vpop.f32.mrb[0].mxu0
    %v290 = vadd.f32 %v78, %v289
    %291 = vmatprep.mubr.f32.mxu0 0.0
    %292 = vmatmul.mubr.f32.gmra.mrb[0].mxu0 %v128
    %v293 = vpop.f32.mrb[0].mxu0
    %v294 = vadd.f32 %v79, %v293
    %v295 = vpop.f32.mrb[0].mxu0
    %v296 = vadd.f32 %v80, %v295
    %297 = vdwg.mxu0
    %v298 = vmul.f32 %v204, 0.5
    %v299 = vmul.f32 %v206, 0.5
    %v300 = vmul.f32 %v210, 0.5
    %v301 = vmul.f32 %v212, 0.5
    %v302 = vmul.f32 %v216, 0.5
    %v303 = vmul.f32 %v218, 0.5
    %v304 = vmul.f32 %v222, 0.5
    %v305 = vmul.f32 %v224, 0.5
    %v306 = vmul.f32 %v228, 0.5
    %v307 = vmul.f32 %v230, 0.5
    %v308 = vmul.f32 %v234, 0.5
    %v309 = vmul.f32 %v236, 0.5
    %v310 = vmul.f32 %v240, 0.5
    %v311 = vmul.f32 %v242, 0.5
    %v312 = vmul.f32 %v246, 0.5
    %v313 = vmul.f32 %v248, 0.5
    %v314 = vmul.f32 %v252, 0.5
    %v315 = vmul.f32 %v254, 0.5
    %v316 = vmul.f32 %v258, 0.5
    %v317 = vmul.f32 %v260, 0.5
    %v318 = vmul.f32 %v264, 0.5
    %v319 = vmul.f32 %v266, 0.5
    %v320 = vmul.f32 %v270, 0.5
    %v321 = vmul.f32 %v272, 0.5
    %v322 = vmul.f32 %v276, 0.5
    %v323 = vmul.f32 %v278, 0.5
    %v324 = vmul.f32 %v282, 0.5
    %v325 = vmul.f32 %v284, 0.5
    %v326 = vmul.f32 %v288, 0.5
    %v327 = vmul.f32 %v290, 0.5
    %v328 = vmul.f32 %v294, 0.5
    %v329 = vmul.f32 %v296, 0.5
    %v330 = vmul.f32 %v204, 0.70710677
    %v331 = vmul.f32 %v206, 0.70710677
    %v332 = vmul.f32 %v210, 0.70710677
    %v333 = vmul.f32 %v212, 0.70710677
    %v334 = vmul.f32 %v216, 0.70710677
    %v335 = vmul.f32 %v218, 0.70710677
    %v336 = vmul.f32 %v222, 0.70710677
    %v337 = vmul.f32 %v224, 0.70710677
    %v338 = vmul.f32 %v228, 0.70710677
    %v339 = vmul.f32 %v230, 0.70710677
    %v340 = vmul.f32 %v234, 0.70710677
    %v341 = vmul.f32 %v236, 0.70710677
    %v342 = vmul.f32 %v240, 0.70710677
    %v343 = vmul.f32 %v242, 0.70710677
    %v344 = vmul.f32 %v246, 0.70710677
    %v345 = vmul.f32 %v248, 0.70710677
    %v346 = vmul.f32 %v252, 0.70710677
    %v347 = vmul.f32 %v254, 0.70710677
    %v348 = vmul.f32 %v258, 0.70710677
    %v349 = vmul.f32 %v260, 0.70710677
    %v350 = vmul.f32 %v264, 0.70710677
    %v351 = vmul.f32 %v266, 0.70710677
    %v352 = vmul.f32 %v270, 0.70710677
    %v353 = vmul.f32 %v272, 0.70710677
    %v354 = vmul.f32 %v276, 0.70710677
    %v355 = vmul.f32 %v278, 0.70710677
    %v356 = vmul.f32 %v282, 0.70710677
    %v357 = vmul.f32 %v284, 0.70710677
    %v358 = vmul.f32 %v288, 0.70710677
    %v359 = vmul.f32 %v290, 0.70710677
    %v360 = vmul.f32 %v294, 0.70710677
    %v361 = vmul.f32 %v296, 0.70710677
    %v362 = verf.f32.pop %v330
    %v363 = verf.f32.pop %v331
    %v364 = verf.f32.pop %v332
    %v365 = verf.f32.pop %v333
    %v366 = verf.f32.pop %v334
    %v367 = verf.f32.pop %v335
    %v368 = verf.f32.pop %v336
    %v369 = verf.f32.pop %v337
    %v370 = verf.f32.pop %v338
    %v371 = verf.f32.pop %v339
    %v372 = verf.f32.pop %v340
    %v373 = verf.f32.pop %v341
    %v374 = verf.f32.pop %v342
    %v375 = verf.f32.pop %v343
    %v376 = verf.f32.pop %v344
    %v377 = verf.f32.pop %v345
    %v378 = verf.f32.pop %v346
    %v379 = verf.f32.pop %v347
    %v380 = verf.f32.pop %v348
    %v381 = verf.f32.pop %v349
    %v382 = verf.f32.pop %v350
    %v383 = verf.f32.pop %v351
    %v384 = verf.f32.pop %v352
    %v385 = verf.f32.pop %v353
    %v386 = verf.f32.pop %v354
    %v387 = verf.f32.pop %v355
    %v388 = verf.f32.pop %v356
    %v389 = verf.f32.pop %v357
    %v390 = verf.f32.pop %v358
    %v391 = verf.f32.pop %v359
    %v392 = verf.f32.pop %v360
    %v393 = verf.f32.pop %v361
    %v394 = vadd.f32 %v362, 1.0
    %v395 = vadd.f32 %v363, 1.0
    %v396 = vadd.f32 %v364, 1.0
    %v397 = vadd.f32 %v365, 1.0
    %v398 = vadd.f32 %v366, 1.0
    %v399 = vadd.f32 %v367, 1.0
    %v400 = vadd.f32 %v368, 1.0
    %v401 = vadd.f32 %v369, 1.0
    %v402 = vadd.f32 %v370, 1.0
    %v403 = vadd.f32 %v371, 1.0
    %v404 = vadd.f32 %v372, 1.0
    %v405 = vadd.f32 %v373, 1.0
    %v406 = vadd.f32 %v374, 1.0
    %v407 = vadd.f32 %v375, 1.0
    %v408 = vadd.f32 %v376, 1.0
    %v409 = vadd.f32 %v377, 1.0
    %v410 = vadd.f32 %v378, 1.0
    %v411 = vadd.f32 %v379, 1.0
    %v412 = vadd.f32 %v380, 1.0
    %v413 = vadd.f32 %v381, 1.0
    %v414 = vadd.f32 %v382, 1.0
    %v415 = vadd.f32 %v383, 1.0
    %v416 = vadd.f32 %v384, 1.0
    %v417 = vadd.f32 %v385, 1.0
    %v418 = vadd.f32 %v386, 1.0
    %v419 = vadd.f32 %v387, 1.0
    %v420 = vadd.f32 %v388, 1.0
    %v421 = vadd.f32 %v389, 1.0
    %v422 = vadd.f32 %v390, 1.0
    %v423 = vadd.f32 %v391, 1.0
    %v424 = vadd.f32 %v392, 1.0
    %v425 = vadd.f32 %v393, 1.0
    %v426 = vmul.f32 %v298, %v394
    %v427 = vmul.f32 %v299, %v395
    %v428 = vmul.f32 %v300, %v396
    %v429 = vmul.f32 %v301, %v397
    %v430 = vmul.f32 %v302, %v398
    %v431 = vmul.f32 %v303, %v399
    %v432 = vmul.f32 %v304, %v400
    %v433 = vmul.f32 %v305, %v401
    %v434 = vmul.f32 %v306, %v402
    %v435 = vmul.f32 %v307, %v403
    %v436 = vmul.f32 %v308, %v404
    %v437 = vmul.f32 %v309, %v405
    %v438 = vmul.f32 %v310, %v406
    %v439 = vmul.f32 %v311, %v407
    %v440 = vmul.f32 %v312, %v408
    %v441 = vmul.f32 %v313, %v409
    %v442 = vmul.f32 %v314, %v410
    %v443 = vmul.f32 %v315, %v411
    %v444 = vmul.f32 %v316, %v412
    %v445 = vmul.f32 %v317, %v413
    %v446 = vmul.f32 %v318, %v414
    %v447 = vmul.f32 %v319, %v415
    %v448 = vmul.f32 %v320, %v416
    %v449 = vmul.f32 %v321, %v417
    %v450 = vmul.f32 %v322, %v418
    %v451 = vmul.f32 %v323, %v419
    %v452 = vmul.f32 %v324, %v420
    %v453 = vmul.f32 %v325, %v421
    %v454 = vmul.f32 %v326, %v422
    %v455 = vmul.f32 %v327, %v423
    %v456 = vmul.f32 %v328, %v424
    %v457 = vmul.f32 %v329, %v425
    %v458 = vld [vmem:[%s3] sm:$0x1]
    %459 = vmatprep.subr.mxu0 %v427
    %460 = vmatpush1.msra.mxu0 %v426
    %461 = vmatprep.subr.mxu0 %v429
    %462 = vmatpush1.msra.mxu0 %v428
    %463 = vmatprep.subr.mxu0 %v431
    %464 = vmatpush1.msra.mxu0 %v430
    %465 = vmatprep.subr.mxu0 %v433
    %466 = vmatpush1.msra.mxu0 %v432
    %467 = vmatprep.subr.mxu0 %v435
    %468 = vmatpush1.msra.mxu0 %v434
    %469 = vmatprep.subr.mxu0 %v437
    %470 = vmatpush1.msra.mxu0 %v436
    %471 = vmatprep.subr.mxu0 %v439
    %472 = vmatpush1.msra.mxu0 %v438
    %473 = vmatprep.subr.mxu0 %v441
    %474 = vmatpush1.msra.mxu0 %v440
    %475 = vmatprep.subr.mxu0 %v443
    %476 = vmatpush1.msra.mxu0 %v442
    %477 = vmatprep.subr.mxu0 %v445
    %478 = vmatpush1.msra.mxu0 %v444
    %479 = vmatprep.subr.mxu0 %v447
    %480 = vmatpush1.msra.mxu0 %v446
    %481 = vmatprep.subr.mxu0 %v449
    %482 = vmatpush1.msra.mxu0 %v448
    %483 = vmatprep.subr.mxu0 %v451
    %484 = vmatpush1.msra.mxu0 %v450
    %485 = vmatprep.subr.mxu0 %v453
    %486 = vmatpush1.msra.mxu0 %v452
    %487 = vmatprep.subr.mxu0 %v455
    %488 = vmatpush1.msra.mxu0 %v454
    %489 = vmatprep.subr.mxu0 %v457
    %490 = vmatpush1.msra.mxu0 %v456
    %491 = vmatprep.subr.mxu0 0.0
    %492 = vmatpush1.msra.mxu0 0.0
    %493 = vmatprep.subr.mxu0 0.0
    %494 = vmatpush1.msra.mxu0 0.0
    %495 = vmatprep.subr.mxu0 0.0
    %496 = vmatpush1.msra.mxu0 0.0
    %497 = vmatprep.subr.mxu0 0.0
    %498 = vmatpush1.msra.mxu0 0.0
    %499 = vmatprep.subr.mxu0 0.0
    %500 = vmatpush1.msra.mxu0 0.0
    %501 = vmatprep.subr.mxu0 0.0
    %502 = vmatpush1.msra.mxu0 0.0
    %503 = vmatprep.subr.mxu0 0.0
    %504 = vmatpush1.msra.mxu0 0.0
    %505 = vmatprep.subr.mxu0 0.0
    %506 = vmatpush1.msra.mxu0 0.0
    %507 = vmatprep.subr.mxu0 0.0
    %508 = vmatpush1.msra.mxu0 0.0
    %509 = vmatprep.subr.mxu0 0.0
    %510 = vmatpush1.msra.mxu0 0.0
    %511 = vmatprep.subr.mxu0 0.0
    %512 = vmatpush1.msra.mxu0 0.0
    %513 = vmatprep.subr.mxu0 0.0
    %514 = vmatpush1.msra.mxu0 0.0
    %515 = vmatprep.subr.mxu0 0.0
    %516 = vmatpush1.msra.mxu0 0.0
    %517 = vmatprep.subr.mxu0 0.0
    %518 = vmatpush1.msra.mxu0 0.0
    %519 = vmatprep.subr.mxu0 0.0
    %520 = vmatpush1.msra.mxu0 0.0
    %521 = vmatprep.subr.mxu0 0.0
    %522 = vmatpush1.msra.mxu0 0.0
    %523 = vmatprep.mubr.f32.mxu0 0.0
    %524 = vmatmul.mubr.f32.gmra.mrb[0].mxu0 %v458
    %v525 = vpop.f32.mrb[0].mxu0
    %v526 = vadd.f32 0.0, %v525
    %v527 = vpop.f32.mrb[0].mxu0
    %v528 = vadd.f32 0.0, %v527
    %529 = vdwg.mxu0
    %v530 = vld [vmem:[%s4] sm:$0xf]
    %v531 = vlaneseq
    %v532 = vshrl.u32 %v531, 7
    %v533 = vsub.s32 0, %v532
    %v534 = vrot.slane %v526, %v533
    %v535 = vlaneseq
    %v536 = vshrl.u32 %v535, 7
    %v537 = vsub.s32 0, %v536
    %v538 = vrot.slane %v528, %v537
    %v541 = vunpack.c.l.s4 1983009808
    %v542 = vunpack.c.0.s8 %v541
    %v543 = vlaneseq
    %v544 = vshrl.u32 %v543, 7
    %v545 = vsub.s32 %v542, %v544
    %v546 = vrot.slane %v530, %v545
    %v547 = vcombine.high %v546, %v546
    %v550 = vmul.f32 %v534, %v546
    %v551 = vmul.f32 %v538, %v547
    %v552 = vld [vmem:[%s5] sm:$0xff]
    %v553 = vld [vmem:[%s5 + $0x8] sm:$0xff]
    %v554 = vld [vmem:[%s5 + $0x10] sm:$0xff]
    %v555 = vld [vmem:[%s5 + $0x18] sm:$0xff]
    %v556 = vld [vmem:[%s5 + $0x20] sm:$0xff]
    %v557 = vld [vmem:[%s5 + $0x28] sm:$0xff]
    %v558 = vld [vmem:[%s5 + $0x30] sm:$0xff]
    %v559 = vld [vmem:[%s5 + $0x38] sm:$0xff]
    %v560 = vld [vmem:[%s5 + $0x40] sm:$0xff]
    %v561 = vld [vmem:[%s5 + $0x48] sm:$0xff]
    %v562 = vld [vmem:[%s5 + $0x50] sm:$0xff]
    %v563 = vld [vmem:[%s5 + $0x58] sm:$0xff]
    %v564 = vld [vmem:[%s5 + $0x60] sm:$0xff]
    %v565 = vld [vmem:[%s5 + $0x68] sm:$0xff]
    %v566 = vld [vmem:[%s5 + $0x70] sm:$0xff]
    %v567 = vld [vmem:[%s5 + $0x78] sm:$0xff]
    %v568 = vld [vmem:[%s5 + $0x80] sm:$0xff]
    %v569 = vld [vmem:[%s5 + $0x88] sm:$0xff]
    %v570 = vld [vmem:[%s6] sm:$0x3]
    %572 = vset.pattern.permute.xlu0 0
    %573 = vperm.xlu0 %572, %v570
    %v574 = vpop.permute.xlu0 %573
    %vm576 = vcmask 130048
    %v578 = vsel %vm576, %v551, 0
    %580 = vmatprep.subr.mxu0 0.0
    %581 = vmatpush1.msra.mxu0 %v552
    %582 = vmatprep.subr.mxu0 0.0
    %583 = vmatpush1.msra.mxu0 %v553
    %584 = vmatprep.subr.mxu0 0.0
    %585 = vmatpush1.msra.mxu0 %v554
    %586 = vmatprep.subr.mxu0 0.0
    %587 = vmatpush1.msra.mxu0 %v555
    %588 = vmatprep.subr.mxu0 0.0
    %589 = vmatpush1.msra.mxu0 %v556
    %590 = vmatprep.subr.mxu0 0.0
    %591 = vmatpush1.msra.mxu0 %v557
    %592 = vmatprep.subr.mxu0 0.0
    %593 = vmatpush1.msra.mxu0 %v558
    %594 = vmatprep.subr.mxu0 0.0
    %595 = vmatpush1.msra.mxu0 %v559
    %596 = vmatprep.subr.mxu0 0.0
    %597 = vmatpush1.msra.mxu0 %v560
    %598 = vmatprep.subr.mxu0 0.0
    %599 = vmatpush1.msra.mxu0 %v561
    %600 = vmatprep.subr.mxu0 0.0
    %601 = vmatpush1.msra.mxu0 %v562
    %602 = vmatprep.subr.mxu0 0.0
    %603 = vmatpush1.msra.mxu0 %v563
    %604 = vmatprep.subr.mxu0 0.0
    %605 = vmatpush1.msra.mxu0 %v564
    %606 = vmatprep.subr.mxu0 0.0
    %607 = vmatpush1.msra.mxu0 %v565
    %608 = vmatprep.subr.mxu0 0.0
    %609 = vmatpush1.msra.mxu0 %v566
    %610 = vmatprep.subr.mxu0 0.0
    %611 = vmatpush1.msra.mxu0 %v567
    %612 = vmatprep.subr.mxu0 0.0
    %613 = vmatpush1.msra.mxu0 %v568
    %614 = vmatprep.subr.mxu0 0.0
    %615 = vmatpush1.msra.mxu0 %v569
    %616 = vmatprep.subr.mxu0 0.0
    %617 = vmatpush1.msra.mxu0 0.0
    %618 = vmatprep.subr.mxu0 0.0
    %619 = vmatpush1.msra.mxu0 0.0
    %620 = vmatprep.subr.mxu0 0.0
    %621 = vmatpush1.msra.mxu0 0.0
    %622 = vmatprep.subr.mxu0 0.0
    %623 = vmatpush1.msra.mxu0 0.0
    %624 = vmatprep.subr.mxu0 0.0
    %625 = vmatpush1.msra.mxu0 0.0
    %626 = vmatprep.subr.mxu0 0.0
    %627 = vmatpush1.msra.mxu0 0.0
    %628 = vmatprep.subr.mxu0 0.0
    %629 = vmatpush1.msra.mxu0 0.0
    %630 = vmatprep.subr.mxu0 0.0
    %631 = vmatpush1.msra.mxu0 0.0
    %632 = vmatprep.subr.mxu0 0.0
    %633 = vmatpush1.msra.mxu0 0.0
    %634 = vmatprep.subr.mxu0 0.0
    %635 = vmatpush1.msra.mxu0 0.0
    %636 = vmatprep.subr.mxu0 0.0
    %637 = vmatpush1.msra.mxu0 0.0
    %638 = vmatprep.subr.mxu0 0.0
    %639 = vmatpush1.msra.mxu0 0.0
    %640 = vmatprep.subr.mxu0 0.0
    %641 = vmatpush1.msra.mxu0 0.0
    %642 = vmatprep.subr.mxu0 0.0
    %643 = vmatpush1.msra.mxu0 0.0
    %644 = vmatprep.mubr.f32.mxu0 %v578
    %645 = vmatmul.mubr.f32.gmra.mrb[0].mxu0 %v550
    %v646 = vpop.f32.mrb[0].mxu0
    %v647 = vadd.f32 %v574, %v646
    %v648 = vpop.f32.mrb[0].mxu0
    %649 = vdwg.mxu0
    %vm650 = vcmask 123904
    %651 = vst.msk [vmem:[#allocation2] sm:$0x3] %vm650, %v647
    // Predicated region
    $region30: #{tpu_custom_call.1} parent=1 // pred_check
      _
    $region31: #{tpu_custom_call.1} parent=1 // pred_check_branch
      %653 = sbr.rel (0) target = $region33
    $region32: #{tpu_custom_call.1} parent=1 // pred_region
      %s655 = ssub.s32 32, 32
      %656 = vsyncadd [#allocation3], %s655
      %s658 = sshll.u32 [#allocation2], 4
      %s659 = int_to_ptr.vmem [resolvable:$true] %s658
      %661 = dma.vmem_to_hbm [thread:$0]  %s659, 32, %s7, [#allocation3]
    $region33: #{tpu_custom_call.1} parent=1 // pred_fallthru
      _
    // Predicated region
    $region34: #{tpu_custom_call.1} parent=1 // pred_check
      _
    $region35: #{tpu_custom_call.1} parent=1 // pred_check_branch
      %663 = sbr.rel (0) target = $region37
    $region36: #{tpu_custom_call.1} parent=1 // pred_region
      %664 = dma.done [#allocation3], 32
    $region37: #{tpu_custom_call.1} parent=1 // pred_fallthru
      _
    %665 = vsyncpa [#allocation3], 1

</llo_original>
